<compile_context>
chip_gen: v7x
topology: tpu7x:2x2x1
jax: 0.10.0
libtpu: 0.0.40
codegen_flags: <defaults>
</compile_context>

<pallas_src>
import functools
import math

import jax
import jax.numpy as jnp
from jax import lax
from jax.experimental import pallas as pl
from jax.experimental.pallas import tpu as pltpu


def _biasfree_layernorm_kernel(x_ref, w_ref, o_ref, *, eps):
    # Cast once to f32 (no-op for f32 inputs); stats need f32 accuracy and
    # v5e has no bf16 VPU.
    x = x_ref[...].astype(jnp.float32)                       # (TM, C)
    c = x.shape[-1]
    inv_c = jnp.float32(1.0 / c)

    # Row reductions on the MXU (vector-extended slot) instead of VPU/XLU.
    ones = jnp.ones((c, 1), dtype=jnp.float32)
    mu = jnp.dot(x, ones, preferred_element_type=jnp.float32) * inv_c   # (TM, 1)

    # Two-pass variance (center only for the variance term): numerically
    # robust, always >= 0, matches torch.var(unbiased=False).
    d = x - mu
    var = jnp.dot(d * d, ones, preferred_element_type=jnp.float32) * inv_c

    w = w_ref[...].astype(jnp.float32)                       # (1, C) broadcast
    o_ref[...] = (x * lax.rsqrt(var + eps) * w).astype(o_ref.dtype)


def _round_up8(v):
    return ((v + 7) // 8) * 8


def _vmem_limit_bytes():
    phys = 128 * 1024 * 1024
    try:
        phys = int(pltpu.get_tpu_info().vmem_capacity_bytes)
    except Exception:
        pass
    # Leave headroom for Mosaic internal scratch:
    #   v5e/v6e (128 MiB physical) -> 96 MiB scoped limit
    #   v7x     ( 64 MiB physical) -> 48 MiB scoped limit
    return int(min(phys * 3 // 4, 96 * 1024 * 1024))


def _pick_block_rows(n, c, itemsize, vmem_limit_bytes):
    # Per-row VMEM footprint:
    #   2 double-buffered input rows + 2 double-buffered output rows
    #   + ~3 rows of f32 in-kernel temporaries (x_f32, centered, products).
    per_row = c * (4 * itemsize + 3 * 4)
    tm_fit = max(8, int(vmem_limit_bytes * 0.6) // max(per_row, 1))

    # ~4 MiB of input per tile keeps the ~0.35us per-grid-step overhead well
    # amortized (measured ~85% of HBM roofline at 1-4 MiB tiles).
    tm_target = max(8, (4 * 1024 * 1024) // max(c * itemsize, 1))

    tm = min(tm_fit, tm_target)

    # Keep >= ~8 grid steps (>= 2 per v7x TensorCore, plus prefetch/writeback
    # overlap) whenever that still leaves tiles of >= 64 rows.
    max_tm_for_steps = _round_up8(pl.cdiv(n, 8))
    if max_tm_for_steps >= 64:
        tm = min(tm, max_tm_for_steps)

    tm = max(8, (tm // 8) * 8)          # f32 sublane multiple
    tm = min(tm, _round_up8(n))          # never bigger than (8-rounded) N
    return tm


def biasfree_layernorm(x, weight, *, eps=1e-5, block_rows=None):
    """Bias-free LayerNorm over the last dim. `x`: (..., C), `weight`: (C,)."""
    orig_shape = x.shape
    c = orig_shape[-1]
    n = math.prod(orig_shape[:-1]) if len(orig_shape) > 1 else 1
    x2d = x.reshape(n, c)
    w2d = weight.reshape(1, c)

    itemsize = jnp.dtype(x.dtype).itemsize
    vmem_limit = _vmem_limit_bytes()
    tm = block_rows if block_rows is not None else _pick_block_rows(
        n, c, itemsize, vmem_limit)

    # Ragged last block: no wrapper pad / slice. OOB reads are undefined but
    # per-row independent; their writes are masked on writeback.
    grid = (pl.cdiv(n, tm),)

    out = pl.pallas_call(
        functools.partial(_biasfree_layernorm_kernel, eps=eps),
        out_shape=jax.ShapeDtypeStruct((n, c), x.dtype),
        grid=grid,
        in_specs=[
            pl.BlockSpec((tm, c), lambda i: (i, 0)),   # pipelined row tile
            pl.BlockSpec((1, c), lambda i: (0, 0)),    # resident weight block
        ],
        out_specs=pl.BlockSpec((tm, c), lambda i: (i, 0)),
        compiler_params=pltpu.CompilerParams(
            dimension_semantics=("parallel",),          # megacore sharding on v7x
            vmem_limit_bytes=vmem_limit,
        ),
        cost_estimate=pl.CostEstimate(
            flops=8 * n * c,
            transcendentals=n,
            bytes_accessed=(2 * n * c + c) * itemsize,
        ),
    )(x2d, w2d)

    return out.reshape(orig_shape)


def _reference(x, weight, eps=1e-5):
    xf = x.astype(jnp.float32)
    var = jnp.var(xf, axis=-1, keepdims=True)           # ddof=0 == unbiased=False
    return (xf * lax.rsqrt(var + eps) * weight.astype(jnp.float32)).astype(x.dtype)


if __name__ == "__main__":
    key = jax.random.PRNGKey(0)
    kx, kw, kx2, kw2 = jax.random.split(key, 4)

    # Channel-last activation with lane-dense C (multiple of 128).
    B, H, W, C = 2, 16, 16, 256
    # Non-zero mean exercises the variance numerics.
    x = jax.random.normal(kx, (B, H, W, C), jnp.float32) + 0.5
    weight = 1.0 + 0.1 * jax.random.normal(kw, (C,), jnp.float32)

    ref = _reference(x, weight)

    # Auto tile size: heuristic splits the 512 rows into >= 8 pipelined steps.
    out_auto = jax.block_until_ready(jax.jit(biasfree_layernorm)(x, weight))
    # Forced tile that does NOT divide 512 rows -> exercises the ragged last
    # block (no wrapper pad / slice).
    out_ragged = jax.block_until_ready(
        jax.jit(functools.partial(biasfree_layernorm, block_rows=96))(x, weight))

    assert out_auto.shape == x.shape and out_ragged.shape == x.shape
    assert bool(jnp.all(jnp.isfinite(out_auto)))
    assert bool(jnp.allclose(out_auto, ref, rtol=1e-4, atol=1e-5))
    assert bool(jnp.allclose(out_ragged, ref, rtol=1e-4, atol=1e-5))

    # Restormer-sized, lane-sparse channel count (C=48), odd row count.
    C2 = 48
    x2 = jax.random.normal(kx2, (2, 8, 10, C2), jnp.float32)
    w2 = 1.0 + 0.1 * jax.random.normal(kw2, (C2,), jnp.float32)
    ref2 = _reference(x2, w2)
    out2 = jax.block_until_ready(jax.jit(biasfree_layernorm)(x2, w2))
    assert out2.shape == x2.shape
    assert bool(jnp.allclose(out2, ref2, rtol=1e-4, atol=1e-5))

    print("KERNEL_OK")
</pallas_src>

<mosaic_0001>
module attributes {stable_mosaic.version = 11 : i64} {
  func.func @_biasfree_layernorm_kernel(%arg0: i32, %arg1: memref<64x256xf32, #tpu.memory_space<vmem>>, %arg2: memref<1x256xf32, #tpu.memory_space<vmem>>, %arg3: memref<64x256xf32, #tpu.memory_space<vmem>>) attributes {dimension_semantics = [#tpu.dimension_semantics<parallel>], iteration_bounds = array<i64: 8>, scalar_prefetch = 0 : i64, scratch_operands = 0 : i64, tpu.core_type = #tpu.core_type<tc>, window_params = [{transform_indices = @transform_0, window_bounds = array<i64: 64, 256>}, {pipeline_mode = #tpu.pipeline_mode<synchronous>, transform_indices = @transform_1, window_bounds = array<i64: 1, 256>}, {transform_indices = @transform_2, window_bounds = array<i64: 64, 256>}]} {
    %c0 = arith.constant 0 : index
    %c0_0 = arith.constant 0 : index
    %0 = vector.load %arg1[%c0, %c0_0] : memref<64x256xf32, #tpu.memory_space<vmem>>, vector<64x256xf32>
    %cst = arith.constant 1.000000e+00 : f32
    %1 = vector.broadcast %cst : f32 to vector<256x1xf32>
    %cst_1 = arith.constant dense<0.000000e+00> : vector<64x1xf32>
    %2 = tpu.matmul %0, %1, %cst_1 {dimension_numbers = #tpu.dot_dimension_numbers<[1], [0], [0], [1], [0, 0, 1, 1], [], []>} : vector<64x256xf32>, vector<256x1xf32>, vector<64x1xf32> -> vector<64x1xf32>
    %cst_2 = arith.constant 3.906250e-03 : f32
    %3 = vector.broadcast %cst_2 : f32 to vector<64x1xf32>
    %4 = arith.mulf %2, %3 : vector<64x1xf32>
    %5 = vector.broadcast %4 : vector<64x1xf32> to vector<64x256xf32>
    %6 = arith.subf %0, %5 : vector<64x256xf32>
    %7 = arith.mulf %6, %6 : vector<64x256xf32>
    %cst_3 = arith.constant dense<0.000000e+00> : vector<64x1xf32>
    %8 = tpu.matmul %7, %1, %cst_3 {dimension_numbers = #tpu.dot_dimension_numbers<[1], [0], [0], [1], [0, 0, 1, 1], [], []>} : vector<64x256xf32>, vector<256x1xf32>, vector<64x1xf32> -> vector<64x1xf32>
    %cst_4 = arith.constant 3.906250e-03 : f32
    %9 = vector.broadcast %cst_4 : f32 to vector<64x1xf32>
    %10 = arith.mulf %8, %9 : vector<64x1xf32>
    %c0_5 = arith.constant 0 : index
    %c0_6 = arith.constant 0 : index
    %11 = vector.load %arg2[%c0_5, %c0_6] : memref<1x256xf32, #tpu.memory_space<vmem>>, vector<1x256xf32>
    %cst_7 = arith.constant 9.99999974E-6 : f32
    %12 = vector.broadcast %cst_7 : f32 to vector<64x1xf32>
    %13 = arith.addf %10, %12 : vector<64x1xf32>
    %14 = math.rsqrt %13 : vector<64x1xf32>
    %15 = vector.broadcast %14 : vector<64x1xf32> to vector<64x256xf32>
    %16 = arith.mulf %0, %15 : vector<64x256xf32>
    %17 = vector.broadcast %11 : vector<1x256xf32> to vector<64x256xf32>
    %18 = arith.mulf %16, %17 : vector<64x256xf32>
    %c0_8 = arith.constant 0 : index
    %c0_9 = arith.constant 0 : index
    %19 = vector.load %arg3[%c0_8, %c0_9] : memref<64x256xf32, #tpu.memory_space<vmem>>, vector<64x256xf32>
    tpu.vector_store %arg3[%c0_8, %c0_9], %18 {strides = array<i32>} : memref<64x256xf32, #tpu.memory_space<vmem>>, vector<64x256xf32>,
    return
  }
  func.func @transform_0(%arg0: i32) -> (i32, i32) {
    %c0_i32 = arith.constant 0 : i32
    %c0_i32_0 = arith.constant 0 : i32
    return %arg0, %c0_i32 : i32, i32
  }
  func.func @transform_1(%arg0: i32) -> (i32, i32) {
    %c0_i32 = arith.constant 0 : i32
    %c0_i32_0 = arith.constant 0 : i32
    %c0_i32_1 = arith.constant 0 : i32
    return %c0_i32, %c0_i32_0 : i32, i32
  }
  func.func @transform_2(%arg0: i32) -> (i32, i32) {
    %c0_i32 = arith.constant 0 : i32
    %c0_i32_0 = arith.constant 0 : i32
    return %arg0, %c0_i32 : i32, i32
  }
}

</mosaic_0001>

<llo_original>
// kernel: biasfree_layernorm.1
$region0: #{biasfree_layernorm.1}
  #allocation0 [shape = 'u32[]', space=smem, size = 0x4, offset = 0x4, fixed_abs, tag = 'smem constant byte address 0x4 - core index']
  #allocation1 [shape = 'u32[144,128]{1,0:T(1,128)}', space=vmem, size = 0x12000, scoped, tag = 'internal scratch']
  %s0 = inlined_call_operand.hbm [shape: f32[512,256], index: 0, kind: input, shape index: {}]
  %s1 = inlined_call_operand.hbm [shape: f32[1,256], index: 1, kind: input, shape index: {}]
  %s2 = inlined_call_operand.hbm [shape: f32[512,256], index: 2, kind: output, shape index: {}]
  %s3 = sld [smem:[#allocation0]]
  $region49: #{biasfree_layernorm.1} parent=0
    _
  %s5 = ssub.s32 1, %s3
  %s6 = scalar_select 0, %s5, %s3
  $region1: #{biasfree_layernorm.1} parent=0
    #allocation2 [shape = 'u8[131072]{0}', space=vmem, size = 0x20000, scoped, tag = 'input window, operand 0']
    #allocation3 [shape = 's32[2]{0}', space=sflag, size = 0x8, scoped, tag = 'scoped memory for biasfree_layernorm.1']
    #allocation4 [shape = 's32[2]{0}', space=sflag, size = 0x8, scoped, tag = 'scoped memory for biasfree_layernorm.1']
    #allocation5 [shape = 'u8[1024]{0}', space=vmem, size = 0x400, scoped, tag = 'input window, operand 1, single buffered']
    #allocation6 [shape = 's32[1]{0}', space=sflag, size = 0x4, scoped, tag = 'scoped memory for biasfree_layernorm.1']
    #allocation7 [shape = 'u8[131072]{0}', space=vmem, size = 0x20000, scoped, tag = 'output window, operand 0']
    %7 = vsyncpa [#allocation3], 0
    %s8 = scalar_lea.sflag [#allocation3], 1
    %9 = vsyncpa %s8, 0
    %10 = vsyncpa [#allocation6], 0
    %11 = vsyncpa [#allocation4], 0
    %s12 = scalar_lea.sflag [#allocation4], 1
    %13 = vsyncpa %s12, 0
    loop: start=0, step=1, limit=10
    $region2: #{biasfree_layernorm.1} parent=1 // loop_pre_header
      _
    $region3: #{biasfree_layernorm.1} parent=1 // loop_header
      %s15 = sphi 0, %s19
      %p16 = scmp.ge.s32.totalorder %s15, 10
      %s25 = sphi 0, %s27
      %s28 = sphi 0, %s25
      %s29 = sphi 0, %s28
      %s45 = sphi 0, %s29
      %s49 = sphi 0, %s49
      %s51 = sphi 0, %s49
      %s52 = sphi 0, %s51
      %s66 = sphi 0, %s52
      %s72 = sphi 0, %s74
      %s75 = sphi 0, %s72
      %s76 = sphi 0, %s75
      %s92 = sphi 0, %s76
    $region4: #{biasfree_layernorm.1} parent=1 // loop_header_branch
      %18 = sbr.rel (%p16) target = $region8
    $region5: #{biasfree_layernorm.1} parent=1 // loop_body
      %s20 = ssub.s32 %s15, 1
      %s21 = ssub.s32 %s15, 2
      %s22 = sadd.s32 %s15, 1
      %s23 = ssub.s32 %s15, %s22
      %p24 = scmp.eq.s32.totalorder %s23, 0
      %s26 = sadd.s32 %s25, 1
      %s27 = scalar_select %p24, %s25, %s26
      %p30 = pneg %p24
      %p31 = scmp.eq.s32.totalorder %s15, 7
      %p32 = por %p30, %p31
      %p33 = scmp.ne.s32.totalorder %s25, %s28
      %p34 = scmp.eq.s32.totalorder %s15, 0
      %p35 = por %p33, %p34
      %p36 = scmp.ne.s32.totalorder %s25, %s28
      %p37 = scmp.eq.s32.totalorder %s20, 7
      %p38 = por %p36, %p37
      %p39 = scmp.ne.s32.totalorder %s28, %s29
      %p40 = scmp.eq.s32.totalorder %s20, 0
      %p41 = por %p39, %p40
      %p42 = scmp.ne.s32.totalorder %s28, %s29
      %p43 = scmp.eq.s32.totalorder %s21, 7
      %p44 = por %p42, %p43
      %p46 = scmp.ne.s32.totalorder %s29, %s45
      %p47 = scmp.eq.s32.totalorder %s21, 0
      %p48 = por %p46, %p47
      %s50 = sadd.s32 %s49, 1
      %p53 = scmp.eq.s32.totalorder %s15, 7
      %p54 = scmp.ne.s32.totalorder %s49, %s51
      %p55 = scmp.eq.s32.totalorder %s15, 0
      %p56 = por %p54, %p55
      %p57 = scmp.ne.s32.totalorder %s49, %s51
      %p58 = scmp.eq.s32.totalorder %s20, 7
      %p59 = por %p57, %p58
      %p60 = scmp.ne.s32.totalorder %s51, %s52
      %p61 = scmp.eq.s32.totalorder %s20, 0
      %p62 = por %p60, %p61
      %p63 = scmp.ne.s32.totalorder %s51, %s52
      %p64 = scmp.eq.s32.totalorder %s21, 7
      %p65 = por %p63, %p64
      %p67 = scmp.ne.s32.totalorder %s52, %s66
      %p68 = scmp.eq.s32.totalorder %s21, 0
      %p69 = por %p67, %p68
      %s70 = ssub.s32 %s15, %s22
      %p71 = scmp.eq.s32.totalorder %s70, 0
      %s73 = sadd.s32 %s72, 1
      %s74 = scalar_select %p71, %s72, %s73
      %p77 = pneg %p71
      %p78 = scmp.eq.s32.totalorder %s15, 7
      %p79 = por %p77, %p78
      %p80 = scmp.ne.s32.totalorder %s72, %s75
      %p81 = scmp.eq.s32.totalorder %s15, 0
      %p82 = por %p80, %p81
      %p83 = scmp.ne.s32.totalorder %s72, %s75
      %p84 = scmp.eq.s32.totalorder %s20, 7
      %p85 = por %p83, %p84
      %p86 = scmp.ne.s32.totalorder %s75, %s76
      %p87 = scmp.eq.s32.totalorder %s20, 0
      %p88 = por %p86, %p87
      %p89 = scmp.ne.s32.totalorder %s75, %s76
      %p90 = scmp.eq.s32.totalorder %s21, 7
      %p91 = por %p89, %p90
      %p93 = scmp.ne.s32.totalorder %s76, %s92
      %p94 = scmp.eq.s32.totalorder %s21, 0
      %p95 = por %p93, %p94
      %p96 = scmp.le.s32.totalorder 1, %s15
      %p97 = scmp.lt.s32.totalorder %s15, 9
      %p98 = pnand %p96, %p97
      %p99 = pneg %p98
      // Predicated region
      $region9: #{biasfree_layernorm.1} parent=5 // pred_check
        _
      $region10: #{biasfree_layernorm.1} parent=5 // pred_check_branch
        %101 = sbr.rel (%p98) target = $region12
      $region11: #{biasfree_layernorm.1} parent=5 // pred_region
        %s102 = ssub.s32 %s15, 1
        // Predicated region
        $region13: #{biasfree_layernorm.1} parent=11 // pred_check
          %p103 = pneg %p62
        $region14: #{biasfree_layernorm.1} parent=11 // pred_check_branch
          %105 = sbr.rel (%p103) target = $region16
        $region15: #{biasfree_layernorm.1} parent=11 // pred_region
          %s107 = ssub.s32 32, 32
          %108 = vsyncadd [#allocation6], %s107
          %s110 = sshll.u32 [#allocation5], 4
          %s111 = int_to_ptr.vmem [resolvable:$true] %s110
          %113 = dma.hbm_to_vmem [thread:$0]  %s1, 32, %s111, [#allocation6]
        $region16: #{biasfree_layernorm.1} parent=11 // pred_fallthru
          _
      $region12: #{biasfree_layernorm.1} parent=5 // pred_fallthru
        _
      %p114 = scmp.lt.s32.totalorder %s15, 8
      // Predicated region
      $region17: #{biasfree_layernorm.1} parent=5 // pred_check
        %p115 = pneg %p114
      $region18: #{biasfree_layernorm.1} parent=5 // pred_check_branch
        %117 = sbr.rel (%p115) target = $region20
      $region19: #{biasfree_layernorm.1} parent=5 // pred_region
        // Predicated region
        $region21: #{biasfree_layernorm.1} parent=19 // pred_check
          %p118 = pneg %p35
        $region22: #{biasfree_layernorm.1} parent=19 // pred_check_branch
          %120 = sbr.rel (%p118) target = $region24
        $region23: #{biasfree_layernorm.1} parent=19 // pred_region
          %s121 = sand.u32 %s25, 1
          %s122 = scalar_lea.sflag [#allocation3], %s121
          %s123 = sand.u32 %s25, 1
          %s124 = smul.addr %s123, 128
          %s125 = scalar_lea.vmem [#allocation2], %s124
          %s126 = smul.u32 8, %s15
          %s128 = ssub.s32 2048, 2048
          %129 = vsyncadd %s122, %s128
          %s130 = smul.addr %s126, 2
          %s131 = smul.addr %s130, 128
          %s132 = scalar_lea.hbm %s0, %s131
          %s133 = sshll.u32 %s125, 4
          %s134 = int_to_ptr.vmem [resolvable:$true] %s133
          %139 = dma.hbm_to_vmem [thread:$0]  %s132, 2048, %s134, %s122, 256, 256, 16
        $region24: #{biasfree_layernorm.1} parent=19 // pred_fallthru
          _
      $region20: #{biasfree_layernorm.1} parent=5 // pred_fallthru
        _
      %p140 = scmp.le.s32.totalorder 1, %s15
      %p141 = scmp.lt.s32.totalorder %s15, 9
      %p142 = pnand %p140, %p141
      %p143 = pneg %p142
      // Predicated region
      $region25: #{biasfree_layernorm.1} parent=5 // pred_check
        _
      $region26: #{biasfree_layernorm.1} parent=5 // pred_check_branch
        %145 = sbr.rel (%p142) target = $region28
      $region27: #{biasfree_layernorm.1} parent=5 // pred_region
        %s146 = ssub.s32 %s15, 1
        %s147 = sand.u32 %s28, 1
        %s148 = scalar_lea.sflag [#allocation3], %s147
        %s149 = sand.u32 %s28, 1
        %s150 = smul.addr %s149, 128
        %s151 = scalar_lea.vmem [#allocation2], %s150
        // Predicated region
        $region29: #{biasfree_layernorm.1} parent=27 // pred_check
          %p152 = pneg %p41
        $region30: #{biasfree_layernorm.1} parent=27 // pred_check_branch
          %154 = sbr.rel (%p152) target = $region32
        $region31: #{biasfree_layernorm.1} parent=27 // pred_region
          %155 = dma.done %s148, 2048
        $region32: #{biasfree_layernorm.1} parent=27 // pred_fallthru
          _
        // Predicated region
        $region33: #{biasfree_layernorm.1} parent=27 // pred_check
          %p156 = pneg %p62
        $region34: #{biasfree_layernorm.1} parent=27 // pred_check_branch
          %158 = sbr.rel (%p156) target = $region36
        $region35: #{biasfree_layernorm.1} parent=27 // pred_region
          %159 = dma.done [#allocation6], 32
        $region36: #{biasfree_layernorm.1} parent=27 // pred_fallthru
          _
        %s160 = sand.u32 %s28, 1
        %s161 = scalar_lea.sflag [#allocation3], %s160
        %s162 = sand.u32 %s28, 1
        %s163 = smul.addr %s162, 128
        %s164 = scalar_lea.vmem [#allocation2], %s163
        %p165 = pneg %p41
        %p166 = pneg %p38
        %p167 = pneg %p62
        %p168 = pneg %p59
        %p169 = pneg %p88
        %p170 = pneg %p85
        %s171 = sand.u32 %s75, 1
        %s172 = scalar_lea.sflag [#allocation4], %s171
        %s173 = sand.u32 %s75, 1
        %s174 = smul.addr %s173, 128
        %s175 = scalar_lea.vmem [#allocation7], %s174
        %s176 = smul.u32 8, %s20
        %s177 = smul.u32 8, %s20
        %v178 = vld [vmem:[%s151] sm:$0xff]
        %v179 = vld [vmem:[%s151 + $0x8] sm:$0xff]
        %v180 = vld [vmem:[%s151 + $0x10] sm:$0xff]
        %v181 = vld [vmem:[%s151 + $0x18] sm:$0xff]
        %v182 = vld [vmem:[%s151 + $0x20] sm:$0xff]
        %v183 = vld [vmem:[%s151 + $0x28] sm:$0xff]
        %v184 = vld [vmem:[%s151 + $0x30] sm:$0xff]
        %v185 = vld [vmem:[%s151 + $0x38] sm:$0xff]
        %v186 = vld [vmem:[%s151 + $0x40] sm:$0xff]
        %v187 = vld [vmem:[%s151 + $0x48] sm:$0xff]
        %v188 = vld [vmem:[%s151 + $0x50] sm:$0xff]
        %v189 = vld [vmem:[%s151 + $0x58] sm:$0xff]
        %v190 = vld [vmem:[%s151 + $0x60] sm:$0xff]
        %v191 = vld [vmem:[%s151 + $0x68] sm:$0xff]
        %v192 = vld [vmem:[%s151 + $0x70] sm:$0xff]
        %v193 = vld [vmem:[%s151 + $0x78] sm:$0xff]
        %194 = vmatprep.subr.mxu0 0.0
        %195 = vmatpush1.msra.mxu0 1.0
        %196 = vmatprep.subr.mxu0 0.0
        %197 = vmatpush1.msra.mxu0 1.0
        %198 = vmatprep.subr.mxu0 0.0
        %199 = vmatpush1.msra.mxu0 1.0
        %200 = vmatprep.subr.mxu0 0.0
        %201 = vmatpush1.msra.mxu0 1.0
        %202 = vmatprep.subr.mxu0 0.0
        %203 = vmatpush1.msra.mxu0 1.0
        %204 = vmatprep.subr.mxu0 0.0
        %205 = vmatpush1.msra.mxu0 1.0
        %206 = vmatprep.subr.mxu0 0.0
        %207 = vmatpush1.msra.mxu0 1.0
        %208 = vmatprep.subr.mxu0 0.0
        %209 = vmatpush1.msra.mxu0 1.0
        %210 = vmatprep.subr.mxu0 0.0
        %211 = vmatpush1.msra.mxu0 1.0
        %212 = vmatprep.subr.mxu0 0.0
        %213 = vmatpush1.msra.mxu0 1.0
        %214 = vmatprep.subr.mxu0 0.0
        %215 = vmatpush1.msra.mxu0 1.0
        %216 = vmatprep.subr.mxu0 0.0
        %217 = vmatpush1.msra.mxu0 1.0
        %218 = vmatprep.subr.mxu0 0.0
        %219 = vmatpush1.msra.mxu0 1.0
        %220 = vmatprep.subr.mxu0 0.0
        %221 = vmatpush1.msra.mxu0 1.0
        %222 = vmatprep.subr.mxu0 0.0
        %223 = vmatpush1.msra.mxu0 1.0
        %224 = vmatprep.subr.mxu0 0.0
        %225 = vmatpush1.msra.mxu0 1.0
        %226 = vmatprep.subr.mxu0 0.0
        %227 = vmatpush1.msra.mxu0 1.0
        %228 = vmatprep.subr.mxu0 0.0
        %229 = vmatpush1.msra.mxu0 1.0
        %230 = vmatprep.subr.mxu0 0.0
        %231 = vmatpush1.msra.mxu0 1.0
        %232 = vmatprep.subr.mxu0 0.0
        %233 = vmatpush1.msra.mxu0 1.0
        %234 = vmatprep.subr.mxu0 0.0
        %235 = vmatpush1.msra.mxu0 1.0
        %236 = vmatprep.subr.mxu0 0.0
        %237 = vmatpush1.msra.mxu0 1.0
        %238 = vmatprep.subr.mxu0 0.0
        %239 = vmatpush1.msra.mxu0 1.0
        %240 = vmatprep.subr.mxu0 0.0
        %241 = vmatpush1.msra.mxu0 1.0
        %242 = vmatprep.subr.mxu0 0.0
        %243 = vmatpush1.msra.mxu0 1.0
        %244 = vmatprep.subr.mxu0 0.0
        %245 = vmatpush1.msra.mxu0 1.0
        %246 = vmatprep.subr.mxu0 0.0
        %247 = vmatpush1.msra.mxu0 1.0
        %248 = vmatprep.subr.mxu0 0.0
        %249 = vmatpush1.msra.mxu0 1.0
        %250 = vmatprep.subr.mxu0 0.0
        %251 = vmatpush1.msra.mxu0 1.0
        %252 = vmatprep.subr.mxu0 0.0
        %253 = vmatpush1.msra.mxu0 1.0
        %254 = vmatprep.subr.mxu0 0.0
        %255 = vmatpush1.msra.mxu0 1.0
        %256 = vmatprep.subr.mxu0 0.0
        %257 = vmatpush1.msra.mxu0 1.0
        %258 = vmatprep.mubr.f32.mxu0 %v179
        %259 = vmatmul.mubr.f32.gmra.mrb[0].mxu0 %v178
        %v260 = vpop.f32.mrb[0].mxu0
        %v261 = vadd.f32 0.0, %v260
        %v262 = vpop.f32.mrb[0].mxu0
        %263 = vmatprep.mubr.f32.mxu0 %v181
        %264 = vmatmul.mubr.f32.gmra.mrb[0].mxu0 %v180
        %v265 = vpop.f32.mrb[0].mxu0
        %v266 = vadd.f32 0.0, %v265
        %v267 = vpop.f32.mrb[0].mxu0
        %268 = vmatprep.mubr.f32.mxu0 %v183
        %269 = vmatmul.mubr.f32.gmra.mrb[0].mxu0 %v182
        %v270 = vpop.f32.mrb[0].mxu0
        %v271 = vadd.f32 0.0, %v270
        %v272 = vpop.f32.mrb[0].mxu0
        %273 = vmatprep.mubr.f32.mxu0 %v185
        %274 = vmatmul.mubr.f32.gmra.mrb[0].mxu0 %v184
        %v275 = vpop.f32.mrb[0].mxu0
        %v276 = vadd.f32 0.0, %v275
        %v277 = vpop.f32.mrb[0].mxu0
        %278 = vmatprep.mubr.f32.mxu0 %v187
        %279 = vmatmul.mubr.f32.gmra.mrb[0].mxu0 %v186
        %v280 = vpop.f32.mrb[0].mxu0
        %v281 = vadd.f32 0.0, %v280
        %v282 = vpop.f32.mrb[0].mxu0
        %283 = vmatprep.mubr.f32.mxu0 %v189
        %284 = vmatmul.mubr.f32.gmra.mrb[0].mxu0 %v188
        %v285 = vpop.f32.mrb[0].mxu0
        %v286 = vadd.f32 0.0, %v285
        %v287 = vpop.f32.mrb[0].mxu0
        %288 = vmatprep.mubr.f32.mxu0 %v191
        %289 = vmatmul.mubr.f32.gmra.mrb[0].mxu0 %v190
        %v290 = vpop.f32.mrb[0].mxu0
        %v291 = vadd.f32 0.0, %v290
        %v292 = vpop.f32.mrb[0].mxu0
        %293 = vmatprep.mubr.f32.mxu0 %v193
        %294 = vmatmul.mubr.f32.gmra.mrb[0].mxu0 %v192
        %v295 = vpop.f32.mrb[0].mxu0
        %v296 = vadd.f32 0.0, %v295
        %v297 = vpop.f32.mrb[0].mxu0
        %298 = vdwg.mxu0
        %v299 = vmul.f32 %v261, 0.00390625
        %v300 = vmul.f32 %v266, 0.00390625
        %v301 = vmul.f32 %v271, 0.00390625
        %v302 = vmul.f32 %v276, 0.00390625
        %v303 = vmul.f32 %v281, 0.00390625
        %v304 = vmul.f32 %v286, 0.00390625
        %v305 = vmul.f32 %v291, 0.00390625
        %v306 = vmul.f32 %v296, 0.00390625
        %308 = vset.pattern.permute.xlu0 0
        %309 = vperm.xlu0 %308, %v299
        %v310 = vpop.permute.xlu0 %309
        %313 = vset.pattern.permute.xlu0 0
        %314 = vperm.xlu0 %313, %v300
        %v315 = vpop.permute.xlu0 %314
        %318 = vset.pattern.permute.xlu0 0
        %319 = vperm.xlu0 %318, %v301
        %v320 = vpop.permute.xlu0 %319
        %323 = vset.pattern.permute.xlu0 0
        %324 = vperm.xlu0 %323, %v302
        %v325 = vpop.permute.xlu0 %324
        %328 = vset.pattern.permute.xlu0 0
        %329 = vperm.xlu0 %328, %v303
        %v330 = vpop.permute.xlu0 %329
        %333 = vset.pattern.permute.xlu0 0
        %334 = vperm.xlu0 %333, %v304
        %v335 = vpop.permute.xlu0 %334
        %338 = vset.pattern.permute.xlu0 0
        %339 = vperm.xlu0 %338, %v305
        %v340 = vpop.permute.xlu0 %339
        %343 = vset.pattern.permute.xlu0 0
        %344 = vperm.xlu0 %343, %v306
        %v345 = vpop.permute.xlu0 %344
        %v347 = vsub.f32 %v178, %v310
        %v348 = vsub.f32 %v179, %v310
        %v349 = vsub.f32 %v180, %v315
        %v350 = vsub.f32 %v181, %v315
        %v351 = vsub.f32 %v182, %v320
        %v352 = vsub.f32 %v183, %v320
        %v353 = vsub.f32 %v184, %v325
        %v354 = vsub.f32 %v185, %v325
        %v355 = vsub.f32 %v186, %v330
        %v356 = vsub.f32 %v187, %v330
        %v357 = vsub.f32 %v188, %v335
        %v358 = vsub.f32 %v189, %v335
        %v359 = vsub.f32 %v190, %v340
        %v360 = vsub.f32 %v191, %v340
        %v361 = vsub.f32 %v192, %v345
        %v362 = vsub.f32 %v193, %v345
        %v363 = vmul.f32 %v347, %v347
        %v364 = vmul.f32 %v348, %v348
        %v365 = vmul.f32 %v349, %v349
        %v366 = vmul.f32 %v350, %v350
        %v367 = vmul.f32 %v351, %v351
        %v368 = vmul.f32 %v352, %v352
        %v369 = vmul.f32 %v353, %v353
        %v370 = vmul.f32 %v354, %v354
        %v371 = vmul.f32 %v355, %v355
        %v372 = vmul.f32 %v356, %v356
        %v373 = vmul.f32 %v357, %v357
        %v374 = vmul.f32 %v358, %v358
        %v375 = vmul.f32 %v359, %v359
        %v376 = vmul.f32 %v360, %v360
        %v377 = vmul.f32 %v361, %v361
        %v378 = vmul.f32 %v362, %v362
        %379 = vmatprep.subr.mxu0 0.0
        %380 = vmatpush1.msra.mxu0 1.0
        %381 = vmatprep.subr.mxu0 0.0
        %382 = vmatpush1.msra.mxu0 1.0
        %383 = vmatprep.subr.mxu0 0.0
        %384 = vmatpush1.msra.mxu0 1.0
        %385 = vmatprep.subr.mxu0 0.0
        %386 = vmatpush1.msra.mxu0 1.0
        %387 = vmatprep.subr.mxu0 0.0
        %388 = vmatpush1.msra.mxu0 1.0
        %389 = vmatprep.subr.mxu0 0.0
        %390 = vmatpush1.msra.mxu0 1.0
        %391 = vmatprep.subr.mxu0 0.0
        %392 = vmatpush1.msra.mxu0 1.0
        %393 = vmatprep.subr.mxu0 0.0
        %394 = vmatpush1.msra.mxu0 1.0
        %395 = vmatprep.subr.mxu0 0.0
        %396 = vmatpush1.msra.mxu0 1.0
        %397 = vmatprep.subr.mxu0 0.0
        %398 = vmatpush1.msra.mxu0 1.0
        %399 = vmatprep.subr.mxu0 0.0
        %400 = vmatpush1.msra.mxu0 1.0
        %401 = vmatprep.subr.mxu0 0.0
        %402 = vmatpush1.msra.mxu0 1.0
        %403 = vmatprep.subr.mxu0 0.0
        %404 = vmatpush1.msra.mxu0 1.0
        %405 = vmatprep.subr.mxu0 0.0
        %406 = vmatpush1.msra.mxu0 1.0
        %407 = vmatprep.subr.mxu0 0.0
        %408 = vmatpush1.msra.mxu0 1.0
        %409 = vmatprep.subr.mxu0 0.0
        %410 = vmatpush1.msra.mxu0 1.0
        %411 = vmatprep.subr.mxu0 0.0
        %412 = vmatpush1.msra.mxu0 1.0
        %413 = vmatprep.subr.mxu0 0.0
        %414 = vmatpush1.msra.mxu0 1.0
        %415 = vmatprep.subr.mxu0 0.0
        %416 = vmatpush1.msra.mxu0 1.0
        %417 = vmatprep.subr.mxu0 0.0
        %418 = vmatpush1.msra.mxu0 1.0
        %419 = vmatprep.subr.mxu0 0.0
        %420 = vmatpush1.msra.mxu0 1.0
        %421 = vmatprep.subr.mxu0 0.0
        %422 = vmatpush1.msra.mxu0 1.0
        %423 = vmatprep.subr.mxu0 0.0
        %424 = vmatpush1.msra.mxu0 1.0
        %425 = vmatprep.subr.mxu0 0.0
        %426 = vmatpush1.msra.mxu0 1.0
        %427 = vmatprep.subr.mxu0 0.0
        %428 = vmatpush1.msra.mxu0 1.0
        %429 = vmatprep.subr.mxu0 0.0
        %430 = vmatpush1.msra.mxu0 1.0
        %431 = vmatprep.subr.mxu0 0.0
        %432 = vmatpush1.msra.mxu0 1.0
        %433 = vmatprep.subr.mxu0 0.0
        %434 = vmatpush1.msra.mxu0 1.0
        %435 = vmatprep.subr.mxu0 0.0
        %436 = vmatpush1.msra.mxu0 1.0
        %437 = vmatprep.subr.mxu0 0.0
        %438 = vmatpush1.msra.mxu0 1.0
        %439 = vmatprep.subr.mxu0 0.0
        %440 = vmatpush1.msra.mxu0 1.0
        %441 = vmatprep.subr.mxu0 0.0
        %442 = vmatpush1.msra.mxu0 1.0
        %443 = vmatprep.mubr.f32.mxu0 %v364
        %444 = vmatmul.mubr.f32.gmra.mrb[0].mxu0 %v363
        %v445 = vpop.f32.mrb[0].mxu0
        %v446 = vadd.f32 0.0, %v445
        %v447 = vpop.f32.mrb[0].mxu0
        %448 = vmatprep.mubr.f32.mxu0 %v366
        %449 = vmatmul.mubr.f32.gmra.mrb[0].mxu0 %v365
        %v450 = vpop.f32.mrb[0].mxu0
        %v451 = vadd.f32 0.0, %v450
        %v452 = vpop.f32.mrb[0].mxu0
        %453 = vmatprep.mubr.f32.mxu0 %v368
        %454 = vmatmul.mubr.f32.gmra.mrb[0].mxu0 %v367
        %v455 = vpop.f32.mrb[0].mxu0
        %v456 = vadd.f32 0.0, %v455
        %v457 = vpop.f32.mrb[0].mxu0
        %458 = vmatprep.mubr.f32.mxu0 %v370
        %459 = vmatmul.mubr.f32.gmra.mrb[0].mxu0 %v369
        %v460 = vpop.f32.mrb[0].mxu0
        %v461 = vadd.f32 0.0, %v460
        %v462 = vpop.f32.mrb[0].mxu0
        %463 = vmatprep.mubr.f32.mxu0 %v372
        %464 = vmatmul.mubr.f32.gmra.mrb[0].mxu0 %v371
        %v465 = vpop.f32.mrb[0].mxu0
        %v466 = vadd.f32 0.0, %v465
        %v467 = vpop.f32.mrb[0].mxu0
        %468 = vmatprep.mubr.f32.mxu0 %v374
        %469 = vmatmul.mubr.f32.gmra.mrb[0].mxu0 %v373
        %v470 = vpop.f32.mrb[0].mxu0
        %v471 = vadd.f32 0.0, %v470
        %v472 = vpop.f32.mrb[0].mxu0
        %473 = vmatprep.mubr.f32.mxu0 %v376
        %474 = vmatmul.mubr.f32.gmra.mrb[0].mxu0 %v375
        %v475 = vpop.f32.mrb[0].mxu0
        %v476 = vadd.f32 0.0, %v475
        %v477 = vpop.f32.mrb[0].mxu0
        %478 = vmatprep.mubr.f32.mxu0 %v378
        %479 = vmatmul.mubr.f32.gmra.mrb[0].mxu0 %v377
        %v480 = vpop.f32.mrb[0].mxu0
        %v481 = vadd.f32 0.0, %v480
        %v482 = vpop.f32.mrb[0].mxu0
        %483 = vdwg.mxu0
        %v484 = vmul.f32 %v446, 0.00390625
        %v485 = vmul.f32 %v451, 0.00390625
        %v486 = vmul.f32 %v456, 0.00390625
        %v487 = vmul.f32 %v461, 0.00390625
        %v488 = vmul.f32 %v466, 0.00390625
        %v489 = vmul.f32 %v471, 0.00390625
        %v490 = vmul.f32 %v476, 0.00390625
        %v491 = vmul.f32 %v481, 0.00390625
        %v492 = vld [vmem:[#allocation5] sm:$0x3]
        %v493 = vadd.f32 %v484, 1e-05
        %v494 = vadd.f32 %v485, 1e-05
        %v495 = vadd.f32 %v486, 1e-05
        %v496 = vadd.f32 %v487, 1e-05
        %v497 = vadd.f32 %v488, 1e-05
        %v498 = vadd.f32 %v489, 1e-05
        %v499 = vadd.f32 %v490, 1e-05
        %v500 = vadd.f32 %v491, 1e-05
        %v501 = vrsqrt.pop %v493
        %v502 = vrsqrt.pop %v494
        %v503 = vrsqrt.pop %v495
        %v504 = vrsqrt.pop %v496
        %v505 = vrsqrt.pop %v497
        %v506 = vrsqrt.pop %v498
        %v507 = vrsqrt.pop %v499
        %v508 = vrsqrt.pop %v500
        %510 = vset.pattern.permute.xlu0 0
        %511 = vperm.xlu0 %510, %v501
        %v512 = vpop.permute.xlu0 %511
        %515 = vset.pattern.permute.xlu0 0
        %516 = vperm.xlu0 %515, %v502
        %v517 = vpop.permute.xlu0 %516
        %520 = vset.pattern.permute.xlu0 0
        %521 = vperm.xlu0 %520, %v503
        %v522 = vpop.permute.xlu0 %521
        %525 = vset.pattern.permute.xlu0 0
        %526 = vperm.xlu0 %525, %v504
        %v527 = vpop.permute.xlu0 %526
        %530 = vset.pattern.permute.xlu0 0
        %531 = vperm.xlu0 %530, %v505
        %v532 = vpop.permute.xlu0 %531
        %535 = vset.pattern.permute.xlu0 0
        %536 = vperm.xlu0 %535, %v506
        %v537 = vpop.permute.xlu0 %536
        %540 = vset.pattern.permute.xlu0 0
        %541 = vperm.xlu0 %540, %v507
        %v542 = vpop.permute.xlu0 %541
        %545 = vset.pattern.permute.xlu0 0
        %546 = vperm.xlu0 %545, %v508
        %v547 = vpop.permute.xlu0 %546
        %v549 = vmul.f32 %v178, %v512
        %v550 = vmul.f32 %v179, %v512
        %v551 = vmul.f32 %v180, %v517
        %v552 = vmul.f32 %v181, %v517
        %v553 = vmul.f32 %v182, %v522
        %v554 = vmul.f32 %v183, %v522
        %v555 = vmul.f32 %v184, %v527
        %v556 = vmul.f32 %v185, %v527
        %v557 = vmul.f32 %v186, %v532
        %v558 = vmul.f32 %v187, %v532
        %v559 = vmul.f32 %v188, %v537
        %v560 = vmul.f32 %v189, %v537
        %v561 = vmul.f32 %v190, %v542
        %v562 = vmul.f32 %v191, %v542
        %v563 = vmul.f32 %v192, %v547
        %v564 = vmul.f32 %v193, %v547
        %v566 = vlaneseq
        %v567 = vshrl.u32 %v566, 7
        %v568 = vsub.s32 0, %v567
        %v569 = vrot.slane %v492, %v568
        %v570 = vlaneseq
        %v571 = vshrl.u32 %v570, 7
        %v572 = vsub.s32 1, %v571
        %v573 = vrot.slane %v492, %v572
        %v576 = vmul.f32 %v549, %v569
        %v577 = vmul.f32 %v550, %v573
        %v578 = vmul.f32 %v551, %v569
        %v579 = vmul.f32 %v552, %v573
        %v580 = vmul.f32 %v553, %v569
        %v581 = vmul.f32 %v554, %v573
        %v582 = vmul.f32 %v555, %v569
        %v583 = vmul.f32 %v556, %v573
        %v584 = vmul.f32 %v557, %v569
        %v585 = vmul.f32 %v558, %v573
        %v586 = vmul.f32 %v559, %v569
        %v587 = vmul.f32 %v560, %v573
        %v588 = vmul.f32 %v561, %v569
        %v589 = vmul.f32 %v562, %v573
        %v590 = vmul.f32 %v563, %v569
        %v591 = vmul.f32 %v564, %v573
        %592 = vst [vmem:[%s175] sm:$0xff] %v576
        %593 = vst [vmem:[%s175 + $0x8] sm:$0xff] %v577
        %594 = vst [vmem:[%s175 + $0x10] sm:$0xff] %v578
        %595 = vst [vmem:[%s175 + $0x18] sm:$0xff] %v579
        %596 = vst [vmem:[%s175 + $0x20] sm:$0xff] %v580
        %597 = vst [vmem:[%s175 + $0x28] sm:$0xff] %v581
        %598 = vst [vmem:[%s175 + $0x30] sm:$0xff] %v582
        %599 = vst [vmem:[%s175 + $0x38] sm:$0xff] %v583
        %600 = vst [vmem:[%s175 + $0x40] sm:$0xff] %v584
        %601 = vst [vmem:[%s175 + $0x48] sm:$0xff] %v585
        %602 = vst [vmem:[%s175 + $0x50] sm:$0xff] %v586
        %603 = vst [vmem:[%s175 + $0x58] sm:$0xff] %v587
        %604 = vst [vmem:[%s175 + $0x60] sm:$0xff] %v588
        %605 = vst [vmem:[%s175 + $0x68] sm:$0xff] %v589
        %606 = vst [vmem:[%s175 + $0x70] sm:$0xff] %v590
        %607 = vst [vmem:[%s175 + $0x78] sm:$0xff] %v591
        %s608 = sand.u32 %s75, 1
        %s609 = scalar_lea.sflag [#allocation4], %s608
        %s610 = sand.u32 %s75, 1
        %s611 = smul.addr %s610, 128
        %s612 = scalar_lea.vmem [#allocation7], %s611
        // Predicated region
        $region37: #{biasfree_layernorm.1} parent=27 // pred_check
          %p613 = pneg %p85
        $region38: #{biasfree_layernorm.1} parent=27 // pred_check_branch
          %615 = sbr.rel (%p613) target = $region40
        $region39: #{biasfree_layernorm.1} parent=27 // pred_region
          %s616 = smul.u32 8, %s20
          %s618 = ssub.s32 2048, 2048
          %619 = vsyncadd %s609, %s618
          %s620 = smul.addr %s616, 2
          %s621 = smul.addr %s620, 128
          %s622 = scalar_lea.hbm %s2, %s621
          %s623 = sshll.u32 %s612, 4
          %s624 = int_to_ptr.vmem [resolvable:$true] %s623
          %629 = dma.vmem_to_hbm [thread:$0]  %s624, 2048, %s622, %s609, 256, 256, 16
        $region40: #{biasfree_layernorm.1} parent=27 // pred_fallthru
          _
      $region28: #{biasfree_layernorm.1} parent=5 // pred_fallthru
        _
      %p630 = scmp.le.s32.totalorder 2, %s15
      // Predicated region
      $region41: #{biasfree_layernorm.1} parent=5 // pred_check
        %p631 = pneg %p630
      $region42: #{biasfree_layernorm.1} parent=5 // pred_check_branch
        %633 = sbr.rel (%p631) target = $region44
      $region43: #{biasfree_layernorm.1} parent=5 // pred_region
        %s634 = ssub.s32 %s15, 2
        // Predicated region
        $region45: #{biasfree_layernorm.1} parent=43 // pred_check
          %p635 = pneg %p91
        $region46: #{biasfree_layernorm.1} parent=43 // pred_check_branch
          %637 = sbr.rel (%p635) target = $region48
        $region47: #{biasfree_layernorm.1} parent=43 // pred_region
          %s638 = sand.u32 %s76, 1
          %s639 = scalar_lea.sflag [#allocation4], %s638
          %s640 = sand.u32 %s76, 1
          %s641 = smul.addr %s640, 128
          %s642 = scalar_lea.vmem [#allocation7], %s641
          %643 = dma.done %s639, 2048
        $region48: #{biasfree_layernorm.1} parent=43 // pred_fallthru
          _
      $region44: #{biasfree_layernorm.1} parent=5 // pred_fallthru
        _
    $region6: #{biasfree_layernorm.1} parent=1 // loop_footer
      %s19 = sadd.s32 1, %s15
    $region7: #{biasfree_layernorm.1} parent=1 // loop_footer_branch
      %14 = sbr.rel target = $region3
    $region8: #{biasfree_layernorm.1} parent=1 // loop_exit
      _
    %644 = vsyncpa [#allocation3], 1
    %s645 = scalar_lea.sflag [#allocation3], 1
    %646 = vsyncpa %s645, 1
    %647 = vsyncpa [#allocation6], 1
    %648 = vsyncpa [#allocation4], 1
    %s649 = scalar_lea.sflag [#allocation4], 1
    %650 = vsyncpa %s649, 1

</llo_original>
